<compile_context>
chip_gen: v5e
topology: v5e:2x2
jax: 0.10.0
libtpu: 0.0.40
codegen_flags: <defaults>
</compile_context>

<pallas_src>
import jax
import jax.numpy as jnp
from jax import lax
from jax.experimental import pallas as pl
from jax.experimental.pallas import tpu as pltpu

CLUSTER_NUM = 16  # stand-in for config.cluster_num


def _linear_kernel(x_ref, w_ref, b_ref, o_ref):
    # x_ref: (tm, D) f32, w_ref: (C, D) f32 (lane-dense nn.Linear layout),
    # b_ref: (1, C) f32,  o_ref: (tm, C) f32
    acc = lax.dot_general(
        x_ref[...], w_ref[...],
        dimension_numbers=(((1,), (1,)), ((), ())),   # contract D with D: x @ W^T
        preferred_element_type=jnp.float32)
    o_ref[...] = (acc + b_ref[...]).astype(o_ref.dtype)


def linear_forward(x, weight, bias, *, block_rows=1024):
    """Reproduces Linear_Model.forward.

    x: 4D (N,C,H,W) -> (N, -1); 3D (C,H,W) -> (1, -1) (matches the module's
       torch.reshape(x, (1, -1)) branch); 2D passes through.
    weight: (out_features, in_features)  (PyTorch convention, used as-is)
    bias:   (out_features,)
    """
    if x.ndim >= 4:
        x2d = x.reshape((x.shape[0], -1))
    elif x.ndim >= 3:
        x2d = x.reshape((1, -1))
    else:
        x2d = x

    x2d = x2d.astype(jnp.float32)
    w = weight.astype(jnp.float32)
    n, d = x2d.shape
    c = w.shape[0]
    b2d = bias.reshape((1, c)).astype(jnp.float32)

    # Tiny-batch path: one full block (block dims == array dims is always legal).
    # Grid path: 1024-row f32 tiles, ragged last block handled by Pallas.
    tm = n if n <= block_rows else block_rows
    grid = (pl.cdiv(n, tm),)

    # Rough double-buffered VMEM estimate; only raise the scoped limit if a
    # caller asks for blocks that exceed v5e's 16 MiB default.
    itemsize = 4
    vmem_est = 2 * tm * d * itemsize + 2 * tm * c * itemsize \
        + 2 * c * d * itemsize + 2 * c * itemsize
    cp_kwargs = dict(dimension_semantics=("parallel",))
    if vmem_est > (14 << 20):
        cp_kwargs["vmem_limit_bytes"] = min(vmem_est + (2 << 20), 60 << 20)

    out = pl.pallas_call(
        _linear_kernel,
        out_shape=jax.ShapeDtypeStruct((n, c), jnp.float32),
        grid=grid,
        in_specs=[
            pl.BlockSpec((tm, d), lambda i: (i, 0)),   # x rows for this block
            pl.BlockSpec((c, d), lambda i: (0, 0)),    # weight resident across grid
            pl.BlockSpec((1, c), lambda i: (0, 0)),    # bias resident across grid
        ],
        out_specs=pl.BlockSpec((tm, c), lambda i: (i, 0)),
        compiler_params=pltpu.CompilerParams(**cp_kwargs),
    )(x2d, w, b2d)

    return out


def init_params(key, input_dim, out_dim, dtype=jnp.float32):
    """Deterministic init mimicking nn.Linear default (uniform +-1/sqrt(fan_in))."""
    kw, kb = jax.random.split(key)
    bound = 1.0 / jnp.sqrt(jnp.array(input_dim, dtype=jnp.float32))
    weight = jax.random.uniform(kw, (out_dim, input_dim), dtype, -bound, bound)
    bias = jax.random.uniform(kb, (out_dim,), dtype, -bound, bound)
    return weight, bias


if __name__ == "__main__":
    key = jax.random.PRNGKey(0)
    kx, kp, kx2, kx3 = jax.random.split(key, 4)

    # Example input consistent with the forward's 4D branch: NCHW
    N, C, H, W = 2, 4, 16, 16
    x = jax.random.normal(kx, (N, C, H, W), jnp.float32)

    input_dim = C * H * W                      # 1024
    weight, bias = init_params(kp, input_dim, CLUSTER_NUM)

    def ref(x2d):
        return jnp.dot(x2d, weight.T, preferred_element_type=jnp.float32) + bias

    # 4D branch (tiny batch -> single full block).
    y = jax.block_until_ready(linear_forward(x, weight, bias))
    assert y.shape == (N, CLUSTER_NUM)
    assert jnp.allclose(y, ref(x.reshape((N, -1))), atol=1e-2, rtol=1e-2)

    # 3D branch: (C,H,W) -> (1, -1).
    x3 = jax.random.normal(kx3, (C, H, W), jnp.float32)
    y3 = jax.block_until_ready(linear_forward(x3, weight, bias))
    assert y3.shape == (1, CLUSTER_NUM)
    assert jnp.allclose(y3, ref(x3.reshape((1, -1))), atol=1e-2, rtol=1e-2)

    # Grid path with a ragged last block (no pad / no output slice):
    # 1300 rows, block_rows=512 -> grid of 3, last block 276 rows (masked store).
    N2 = 1300
    x2 = jax.random.normal(kx2, (N2, input_dim), jnp.float32)
    y2 = jax.block_until_ready(linear_forward(x2, weight, bias, block_rows=512))
    assert y2.shape == (N2, CLUSTER_NUM)
    assert jnp.allclose(y2, ref(x2), atol=1e-2, rtol=1e-2)

    print("KERNEL_OK")
</pallas_src>

<mosaic_0001>
module attributes {stable_mosaic.version = 11 : i64} {
  func.func @_linear_kernel(%arg0: i32, %arg1: memref<2x1024xf32, #tpu.memory_space<vmem>>, %arg2: memref<16x1024xf32, #tpu.memory_space<vmem>>, %arg3: memref<1x16xf32, #tpu.memory_space<vmem>>, %arg4: memref<2x16xf32, #tpu.memory_space<vmem>>) attributes {dimension_semantics = [#tpu.dimension_semantics<parallel>], iteration_bounds = array<i64: 1>, scalar_prefetch = 0 : i64, scratch_operands = 0 : i64, tpu.core_type = #tpu.core_type<tc>, window_params = [{transform_indices = @transform_0, window_bounds = array<i64: 2, 1024>}, {pipeline_mode = #tpu.pipeline_mode<synchronous>, transform_indices = @transform_1, window_bounds = array<i64: 16, 1024>}, {pipeline_mode = #tpu.pipeline_mode<synchronous>, transform_indices = @transform_2, window_bounds = array<i64: 1, 16>}, {transform_indices = @transform_3, window_bounds = array<i64: 2, 16>}]} {
    %c0 = arith.constant 0 : index
    %c0_0 = arith.constant 0 : index
    %0 = vector.load %arg1[%c0, %c0_0] : memref<2x1024xf32, #tpu.memory_space<vmem>>, vector<2x1024xf32>
    %c0_1 = arith.constant 0 : index
    %c0_2 = arith.constant 0 : index
    %1 = vector.load %arg2[%c0_1, %c0_2] : memref<16x1024xf32, #tpu.memory_space<vmem>>, vector<16x1024xf32>
    %cst = arith.constant dense<0.000000e+00> : vector<2x16xf32>
    %2 = tpu.matmul %0, %1, %cst {dimension_numbers = #tpu.dot_dimension_numbers<[1], [1], [0], [0], [0, 0, 1, 0], [], []>} : vector<2x1024xf32>, vector<16x1024xf32>, vector<2x16xf32> -> vector<2x16xf32>
    %c0_3 = arith.constant 0 : index
    %c0_4 = arith.constant 0 : index
    %3 = vector.load %arg3[%c0_3, %c0_4] : memref<1x16xf32, #tpu.memory_space<vmem>>, vector<1x16xf32>
    %4 = vector.broadcast %3 : vector<1x16xf32> to vector<2x16xf32>
    %5 = arith.addf %2, %4 : vector<2x16xf32>
    %c0_5 = arith.constant 0 : index
    %c0_6 = arith.constant 0 : index
    %6 = vector.load %arg4[%c0_5, %c0_6] : memref<2x16xf32, #tpu.memory_space<vmem>>, vector<2x16xf32>
    tpu.vector_store %arg4[%c0_5, %c0_6], %5 {strides = array<i32>} : memref<2x16xf32, #tpu.memory_space<vmem>>, vector<2x16xf32>,
    return
  }
  func.func @transform_0(%arg0: i32) -> (i32, i32) {
    %c0_i32 = arith.constant 0 : i32
    %c0_i32_0 = arith.constant 0 : i32
    return %arg0, %c0_i32 : i32, i32
  }
  func.func @transform_1(%arg0: i32) -> (i32, i32) {
    %c0_i32 = arith.constant 0 : i32
    %c0_i32_0 = arith.constant 0 : i32
    %c0_i32_1 = arith.constant 0 : i32
    return %c0_i32, %c0_i32_0 : i32, i32
  }
  func.func @transform_2(%arg0: i32) -> (i32, i32) {
    %c0_i32 = arith.constant 0 : i32
    %c0_i32_0 = arith.constant 0 : i32
    %c0_i32_1 = arith.constant 0 : i32
    return %c0_i32, %c0_i32_0 : i32, i32
  }
  func.func @transform_3(%arg0: i32) -> (i32, i32) {
    %c0_i32 = arith.constant 0 : i32
    %c0_i32_0 = arith.constant 0 : i32
    return %arg0, %c0_i32 : i32, i32
  }
}

</mosaic_0001>

<llo_original>
// kernel: tpu_custom_call.1
$region0: #{tpu_custom_call.1}
  #allocation0 [shape = 'u32[]', space=smem, size = 0x4, offset = 0x4, fixed_abs, tag = 'smem constant byte address 0x4 - core index']
  #allocation1 [shape = 'u32[72,128]{1,0:T(1,128)}', space=vmem, size = 0x9000, scoped, tag = 'internal scratch']
  %s0 = inlined_call_operand.hbm [shape: f32[2,1024], index: 0, kind: input, shape index: {}]
  %s1 = inlined_call_operand.hbm [shape: f32[16,1024], index: 1, kind: input, shape index: {}]
  %s2 = inlined_call_operand.vmem [shape: f32[1,16], index: 2, kind: input, shape index: {}]
  %s3 = inlined_call_operand.hbm [shape: f32[2,16], index: 3, kind: output, shape index: {}]
  %s4 = sld [smem:[#allocation0]]
  $region30: #{tpu_custom_call.1} parent=0
    _
  %s6 = ssub.s32 1, %s4
  %s7 = scalar_select 0, %s6, %s4
  $region1: #{tpu_custom_call.1} parent=0
    #allocation2 [shape = 'u8[8192]{0}', space=vmem, size = 0x2000, scoped, tag = 'input window, operand 0, single buffered']
    #allocation3 [shape = 's32[1]{0}', space=sflag, size = 0x4, scoped, tag = 'scoped memory for tpu_custom_call.1']
    #allocation4 [shape = 's32[1]{0}', space=sflag, size = 0x4, scoped, tag = 'scoped memory for tpu_custom_call.1']
    #allocation5 [shape = 'u8[65536]{0}', space=vmem, size = 0x10000, scoped, tag = 'input window, operand 1, single buffered']
    #allocation6 [shape = 's32[1]{0}', space=sflag, size = 0x4, scoped, tag = 'scoped memory for tpu_custom_call.1']
    #allocation7 [shape = 'u8[1024]{0}', space=vmem, size = 0x400, scoped, tag = 'output window, operand 0, single buffered']
    %8 = vsyncpa [#allocation3], 0
    %9 = vsyncpa [#allocation6], 0
    %10 = vsyncpa [#allocation4], 0
    // Predicated region
    $region2: #{tpu_custom_call.1} parent=1 // pred_check
      _
    $region3: #{tpu_custom_call.1} parent=1 // pred_check_branch
      %12 = sbr.rel (0) target = $region5
    $region4: #{tpu_custom_call.1} parent=1 // pred_region
      %14 = vsyncadd [#allocation3], 0
      %s16 = sshll.u32 %s0, 4
      %s17 = int_to_ptr.hbm [resolvable:$true] %s16
      %s18 = sshll.u32 [#allocation2], 4
      %s19 = int_to_ptr.vmem [resolvable:$true] %s18
      %21 = dma.hbm_to_vmem [thread:$0]  %s17, 256, %s19, [#allocation3]
    $region5: #{tpu_custom_call.1} parent=1 // pred_fallthru
      _
    // Predicated region
    $region6: #{tpu_custom_call.1} parent=1 // pred_check
      _
    $region7: #{tpu_custom_call.1} parent=1 // pred_check_branch
      %23 = sbr.rel (0) target = $region9
    $region8: #{tpu_custom_call.1} parent=1 // pred_region
      %25 = vsyncadd [#allocation6], 0
      %s26 = sshll.u32 %s1, 4
      %s27 = int_to_ptr.hbm [resolvable:$true] %s26
      %s28 = sshll.u32 [#allocation5], 4
      %s29 = int_to_ptr.vmem [resolvable:$true] %s28
      %34 = dma.hbm_to_vmem [thread:$0]  %s27, 2048, %s29, [#allocation6], 1024, 1024, 64
    $region9: #{tpu_custom_call.1} parent=1 // pred_fallthru
      _
    // Predicated region
    $region10: #{tpu_custom_call.1} parent=1 // pred_check
      _
    $region11: #{tpu_custom_call.1} parent=1 // pred_check_branch
      %36 = sbr.rel (0) target = $region13
    $region12: #{tpu_custom_call.1} parent=1 // pred_region
      _
    $region13: #{tpu_custom_call.1} parent=1 // pred_fallthru
      _
    // Predicated region
    $region14: #{tpu_custom_call.1} parent=1 // pred_check
      _
    $region15: #{tpu_custom_call.1} parent=1 // pred_check_branch
      %38 = sbr.rel (0) target = $region17
    $region16: #{tpu_custom_call.1} parent=1 // pred_region
      %40 = dma.done [#allocation3], 256
    $region17: #{tpu_custom_call.1} parent=1 // pred_fallthru
      _
    // Predicated region
    $region18: #{tpu_custom_call.1} parent=1 // pred_check
      _
    $region19: #{tpu_custom_call.1} parent=1 // pred_check_branch
      %42 = sbr.rel (0) target = $region21
    $region20: #{tpu_custom_call.1} parent=1 // pred_region
      %44 = dma.done [#allocation6], 2048
    $region21: #{tpu_custom_call.1} parent=1 // pred_fallthru
      _
    %v45 = vld [vmem:[#allocation2] sm:$0xff]
    %v46 = vld [vmem:[#allocation2 + $0x8] sm:$0xff]
    %v47 = vld [vmem:[#allocation5] sm:$0xff]
    %v48 = vld [vmem:[#allocation5 + $0x8] sm:$0xff]
    %v49 = vld [vmem:[#allocation5 + $0x10] sm:$0xff]
    %v50 = vld [vmem:[#allocation5 + $0x18] sm:$0xff]
    %v51 = vld [vmem:[#allocation5 + $0x20] sm:$0xff]
    %v52 = vld [vmem:[#allocation5 + $0x28] sm:$0xff]
    %v53 = vld [vmem:[#allocation5 + $0x30] sm:$0xff]
    %v54 = vld [vmem:[#allocation5 + $0x38] sm:$0xff]
    %v55 = vld [vmem:[#allocation5 + $0x40] sm:$0xff]
    %v56 = vld [vmem:[#allocation5 + $0x48] sm:$0xff]
    %v57 = vld [vmem:[#allocation5 + $0x50] sm:$0xff]
    %v58 = vld [vmem:[#allocation5 + $0x58] sm:$0xff]
    %v59 = vld [vmem:[#allocation5 + $0x60] sm:$0xff]
    %v60 = vld [vmem:[#allocation5 + $0x68] sm:$0xff]
    %v61 = vld [vmem:[#allocation5 + $0x70] sm:$0xff]
    %v62 = vld [vmem:[#allocation5 + $0x78] sm:$0xff]
    %v63 = vld [vmem:[%s2] sm:$0x1]
    %v65 = vperm.slane %v63, 0
    %69 = vst [vmem:[#allocation1] ss:$4 sm:$0xff] %v45
    %s70 = scalar_lea.vmem [#allocation1], 32
    %71 = vst [vmem:[%s70] ss:$4 sm:$0xff] %v46
    %v72 = vld.sshfl [vmem:[#allocation1] sm:$0xff pattern:$0x73625140]
    %v73 = vld.sshfl [vmem:[#allocation1 + $0x8] sm:$0xff pattern:$0x73625140]
    %v74 = vld.sshfl [vmem:[#allocation1 + $0x10] sm:$0xff pattern:$0x73625140]
    %v75 = vld.sshfl [vmem:[#allocation1 + $0x18] sm:$0xff pattern:$0x73625140]
    %v76 = vld.sshfl [vmem:[#allocation1 + $0x20] sm:$0xff pattern:$0x73625140]
    %v77 = vld.sshfl [vmem:[#allocation1 + $0x28] sm:$0xff pattern:$0x73625140]
    %v78 = vld.sshfl [vmem:[#allocation1 + $0x30] sm:$0xff pattern:$0x73625140]
    %v79 = vld.sshfl [vmem:[#allocation1 + $0x38] sm:$0xff pattern:$0x73625140]
    %88 = vmatpush.xpose.msra.mxu0 0.0
    %89 = vmatpush.xpose.msra.mxu0 0.0
    %90 = vmatpush.xpose.msra.mxu0 0.0
    %91 = vmatpush.xpose.msra.mxu0 0.0
    %92 = vmatpush.xpose.msra.mxu0 0.0
    %93 = vmatpush.xpose.msra.mxu0 0.0
    %94 = vmatpush.xpose.msra.mxu0 0.0
    %95 = vmatpush.xpose.msra.mxu0 0.0
    %96 = vmatpush.xpose.msra.mxu0 0.0
    %97 = vmatpush.xpose.msra.mxu0 0.0
    %98 = vmatpush.xpose.msra.mxu0 0.0
    %99 = vmatpush.xpose.msra.mxu0 0.0
    %100 = vmatpush.xpose.msra.mxu0 0.0
    %101 = vmatpush.xpose.msra.mxu0 0.0
    %102 = vmatpush.xpose.msra.mxu0 %v55
    %103 = vmatpush.xpose.msra.mxu0 %v47
    %104 = vmatmul.f32.gmra.mxu0 %v72
    %v105 = vpop.f32.mrf.mxu0
    %v106 = vadd.f32 %v65, %v105
    %107 = vdwg.mxu0
    %108 = vmatpush.xpose.msra.mxu0 0.0
    %109 = vmatpush.xpose.msra.mxu0 0.0
    %110 = vmatpush.xpose.msra.mxu0 0.0
    %111 = vmatpush.xpose.msra.mxu0 0.0
    %112 = vmatpush.xpose.msra.mxu0 0.0
    %113 = vmatpush.xpose.msra.mxu0 0.0
    %114 = vmatpush.xpose.msra.mxu0 0.0
    %115 = vmatpush.xpose.msra.mxu0 0.0
    %116 = vmatpush.xpose.msra.mxu0 0.0
    %117 = vmatpush.xpose.msra.mxu0 0.0
    %118 = vmatpush.xpose.msra.mxu0 0.0
    %119 = vmatpush.xpose.msra.mxu0 0.0
    %120 = vmatpush.xpose.msra.mxu0 0.0
    %121 = vmatpush.xpose.msra.mxu0 0.0
    %122 = vmatpush.xpose.msra.mxu0 %v56
    %123 = vmatpush.xpose.msra.mxu0 %v48
    %124 = vmatmul.f32.gmra.mxu0 %v73
    %v125 = vpop.f32.mrf.mxu0
    %v126 = vadd.f32 %v106, %v125
    %127 = vdwg.mxu0
    %128 = vmatpush.xpose.msra.mxu0 0.0
    %129 = vmatpush.xpose.msra.mxu0 0.0
    %130 = vmatpush.xpose.msra.mxu0 0.0
    %131 = vmatpush.xpose.msra.mxu0 0.0
    %132 = vmatpush.xpose.msra.mxu0 0.0
    %133 = vmatpush.xpose.msra.mxu0 0.0
    %134 = vmatpush.xpose.msra.mxu0 0.0
    %135 = vmatpush.xpose.msra.mxu0 0.0
    %136 = vmatpush.xpose.msra.mxu0 0.0
    %137 = vmatpush.xpose.msra.mxu0 0.0
    %138 = vmatpush.xpose.msra.mxu0 0.0
    %139 = vmatpush.xpose.msra.mxu0 0.0
    %140 = vmatpush.xpose.msra.mxu0 0.0
    %141 = vmatpush.xpose.msra.mxu0 0.0
    %142 = vmatpush.xpose.msra.mxu0 %v57
    %143 = vmatpush.xpose.msra.mxu0 %v49
    %144 = vmatmul.f32.gmra.mxu0 %v74
    %v145 = vpop.f32.mrf.mxu0
    %v146 = vadd.f32 %v126, %v145
    %147 = vdwg.mxu0
    %148 = vmatpush.xpose.msra.mxu0 0.0
    %149 = vmatpush.xpose.msra.mxu0 0.0
    %150 = vmatpush.xpose.msra.mxu0 0.0
    %151 = vmatpush.xpose.msra.mxu0 0.0
    %152 = vmatpush.xpose.msra.mxu0 0.0
    %153 = vmatpush.xpose.msra.mxu0 0.0
    %154 = vmatpush.xpose.msra.mxu0 0.0
    %155 = vmatpush.xpose.msra.mxu0 0.0
    %156 = vmatpush.xpose.msra.mxu0 0.0
    %157 = vmatpush.xpose.msra.mxu0 0.0
    %158 = vmatpush.xpose.msra.mxu0 0.0
    %159 = vmatpush.xpose.msra.mxu0 0.0
    %160 = vmatpush.xpose.msra.mxu0 0.0
    %161 = vmatpush.xpose.msra.mxu0 0.0
    %162 = vmatpush.xpose.msra.mxu0 %v58
    %163 = vmatpush.xpose.msra.mxu0 %v50
    %164 = vmatmul.f32.gmra.mxu0 %v75
    %v165 = vpop.f32.mrf.mxu0
    %v166 = vadd.f32 %v146, %v165
    %167 = vdwg.mxu0
    %168 = vmatpush.xpose.msra.mxu0 0.0
    %169 = vmatpush.xpose.msra.mxu0 0.0
    %170 = vmatpush.xpose.msra.mxu0 0.0
    %171 = vmatpush.xpose.msra.mxu0 0.0
    %172 = vmatpush.xpose.msra.mxu0 0.0
    %173 = vmatpush.xpose.msra.mxu0 0.0
    %174 = vmatpush.xpose.msra.mxu0 0.0
    %175 = vmatpush.xpose.msra.mxu0 0.0
    %176 = vmatpush.xpose.msra.mxu0 0.0
    %177 = vmatpush.xpose.msra.mxu0 0.0
    %178 = vmatpush.xpose.msra.mxu0 0.0
    %179 = vmatpush.xpose.msra.mxu0 0.0
    %180 = vmatpush.xpose.msra.mxu0 0.0
    %181 = vmatpush.xpose.msra.mxu0 0.0
    %182 = vmatpush.xpose.msra.mxu0 %v59
    %183 = vmatpush.xpose.msra.mxu0 %v51
    %184 = vmatmul.f32.gmra.mxu0 %v76
    %v185 = vpop.f32.mrf.mxu0
    %v186 = vadd.f32 %v166, %v185
    %187 = vdwg.mxu0
    %188 = vmatpush.xpose.msra.mxu0 0.0
    %189 = vmatpush.xpose.msra.mxu0 0.0
    %190 = vmatpush.xpose.msra.mxu0 0.0
    %191 = vmatpush.xpose.msra.mxu0 0.0
    %192 = vmatpush.xpose.msra.mxu0 0.0
    %193 = vmatpush.xpose.msra.mxu0 0.0
    %194 = vmatpush.xpose.msra.mxu0 0.0
    %195 = vmatpush.xpose.msra.mxu0 0.0
    %196 = vmatpush.xpose.msra.mxu0 0.0
    %197 = vmatpush.xpose.msra.mxu0 0.0
    %198 = vmatpush.xpose.msra.mxu0 0.0
    %199 = vmatpush.xpose.msra.mxu0 0.0
    %200 = vmatpush.xpose.msra.mxu0 0.0
    %201 = vmatpush.xpose.msra.mxu0 0.0
    %202 = vmatpush.xpose.msra.mxu0 %v60
    %203 = vmatpush.xpose.msra.mxu0 %v52
    %204 = vmatmul.f32.gmra.mxu0 %v77
    %v205 = vpop.f32.mrf.mxu0
    %v206 = vadd.f32 %v186, %v205
    %207 = vdwg.mxu0
    %208 = vmatpush.xpose.msra.mxu0 0.0
    %209 = vmatpush.xpose.msra.mxu0 0.0
    %210 = vmatpush.xpose.msra.mxu0 0.0
    %211 = vmatpush.xpose.msra.mxu0 0.0
    %212 = vmatpush.xpose.msra.mxu0 0.0
    %213 = vmatpush.xpose.msra.mxu0 0.0
    %214 = vmatpush.xpose.msra.mxu0 0.0
    %215 = vmatpush.xpose.msra.mxu0 0.0
    %216 = vmatpush.xpose.msra.mxu0 0.0
    %217 = vmatpush.xpose.msra.mxu0 0.0
    %218 = vmatpush.xpose.msra.mxu0 0.0
    %219 = vmatpush.xpose.msra.mxu0 0.0
    %220 = vmatpush.xpose.msra.mxu0 0.0
    %221 = vmatpush.xpose.msra.mxu0 0.0
    %222 = vmatpush.xpose.msra.mxu0 %v61
    %223 = vmatpush.xpose.msra.mxu0 %v53
    %224 = vmatmul.f32.gmra.mxu0 %v78
    %v225 = vpop.f32.mrf.mxu0
    %v226 = vadd.f32 %v206, %v225
    %227 = vdwg.mxu0
    %228 = vmatpush.xpose.msra.mxu0 0.0
    %229 = vmatpush.xpose.msra.mxu0 0.0
    %230 = vmatpush.xpose.msra.mxu0 0.0
    %231 = vmatpush.xpose.msra.mxu0 0.0
    %232 = vmatpush.xpose.msra.mxu0 0.0
    %233 = vmatpush.xpose.msra.mxu0 0.0
    %234 = vmatpush.xpose.msra.mxu0 0.0
    %235 = vmatpush.xpose.msra.mxu0 0.0
    %236 = vmatpush.xpose.msra.mxu0 0.0
    %237 = vmatpush.xpose.msra.mxu0 0.0
    %238 = vmatpush.xpose.msra.mxu0 0.0
    %239 = vmatpush.xpose.msra.mxu0 0.0
    %240 = vmatpush.xpose.msra.mxu0 0.0
    %241 = vmatpush.xpose.msra.mxu0 0.0
    %242 = vmatpush.xpose.msra.mxu0 %v62
    %243 = vmatpush.xpose.msra.mxu0 %v54
    %244 = vmatmul.f32.gmra.mxu0 %v79
    %v245 = vpop.f32.mrf.mxu0
    %v246 = vadd.f32 %v226, %v245
    %247 = vdwg.mxu0
    %vm248 = vcmask 123904
    %249 = vst.msk [vmem:[#allocation7] sm:$0x3] %vm248, %v246
    // Predicated region
    $region22: #{tpu_custom_call.1} parent=1 // pred_check
      _
    $region23: #{tpu_custom_call.1} parent=1 // pred_check_branch
      %251 = sbr.rel (0) target = $region25
    $region24: #{tpu_custom_call.1} parent=1 // pred_region
      %253 = vsyncadd [#allocation4], 0
      %s255 = sshll.u32 [#allocation7], 4
      %s256 = int_to_ptr.vmem [resolvable:$true] %s255
      %s257 = sshll.u32 %s3, 4
      %s258 = int_to_ptr.hbm [resolvable:$true] %s257
      %260 = dma.vmem_to_hbm [thread:$0]  %s256, 32, %s258, [#allocation4]
    $region25: #{tpu_custom_call.1} parent=1 // pred_fallthru
      _
    // Predicated region
    $region26: #{tpu_custom_call.1} parent=1 // pred_check
      _
    $region27: #{tpu_custom_call.1} parent=1 // pred_check_branch
      %262 = sbr.rel (0) target = $region29
    $region28: #{tpu_custom_call.1} parent=1 // pred_region
      %264 = dma.done [#allocation4], 32
    $region29: #{tpu_custom_call.1} parent=1 // pred_fallthru
      _
    %265 = vsyncpa [#allocation3], 1
    %266 = vsyncpa [#allocation6], 1
    %267 = vsyncpa [#allocation4], 1

</llo_original>
